<compile_context>
chip_gen: v6e
topology: v6e:2x2x1
jax: 0.10.0
libtpu: 0.0.40
codegen_flags: <defaults>
</compile_context>

<pallas_src>
import functools

import jax
import jax.numpy as jnp
from jax.experimental import pallas as pl
from jax.experimental.pallas import tpu as pltpu

LOG_STD_MIN = -20.0   # unreachable after relu(log_std) >= 0; kept for documentation
LOG_STD_MAX = 2.0
HIDDEN = 256


def _round_up(x, m):
    return (x + m - 1) // m * m


# ---------------------------------------------------------------------------
# Kernel
# ---------------------------------------------------------------------------
def actor_kernel(state_ref,
                 w1_ref, b1_ref,
                 w2_ref, b2_ref,
                 wh_ref, bh_ref,
                 out_ref, *, action_dim):
    # l1 + relu  (bf16 MXU operands, f32 accumulation)
    x = state_ref[...].astype(jnp.bfloat16)                        # (TB, S_pad)
    h1 = jnp.dot(x, w1_ref[...], preferred_element_type=jnp.float32) + b1_ref[...]
    h1 = jnp.maximum(h1, 0.0).astype(jnp.bfloat16)                 # (TB, 256)

    # l2 + relu
    h2 = jnp.dot(h1, w2_ref[...], preferred_element_type=jnp.float32) + b2_ref[...]
    h2 = jnp.maximum(h2, 0.0).astype(jnp.bfloat16)                 # (TB, 256)

    # fused heads: columns [0,A) = mu weights, [A,2A) = log_std weights, rest 0
    head = jnp.dot(h2, wh_ref[...], preferred_element_type=jnp.float32) + bh_ref[...]

    # std head: relu -> min(., 2) -> exp   (lower clamp at -20 is dead after relu)
    std = jnp.exp(jnp.minimum(jnp.maximum(head, 0.0), LOG_STD_MAX))

    # select per-lane: mu lanes keep raw head, std lanes get exp(...)
    col = jax.lax.broadcasted_iota(jnp.int32, head.shape, 1)
    out_ref[...] = jnp.where(col >= action_dim, std, head).astype(out_ref.dtype)


# ---------------------------------------------------------------------------
# Parameter prep / wrapper
# ---------------------------------------------------------------------------
def init_actor_params(key, state_dim, action_dim, hidden=HIDDEN):
    """nn.Linear-style init (uniform +-1/sqrt(fan_in)); weights stored (in, out)."""
    keys = jax.random.split(key, 8)

    def linear(kw, kb, fan_in, fan_out):
        bound = 1.0 / jnp.sqrt(jnp.float32(fan_in))
        w = jax.random.uniform(kw, (fan_in, fan_out), jnp.float32, -bound, bound)
        b = jax.random.uniform(kb, (1, fan_out), jnp.float32, -bound, bound)
        return w, b

    w1, b1 = linear(keys[0], keys[1], state_dim, hidden)
    w2, b2 = linear(keys[2], keys[3], hidden, hidden)
    w3, b3 = linear(keys[4], keys[5], hidden, action_dim)
    w4, b4 = linear(keys[6], keys[7], hidden, action_dim)
    return {"w1": w1, "b1": b1, "w2": w2, "b2": b2,
            "w3": w3, "b3": b3, "w4": w4, "b4": b4}


def prepare_actor_params(raw, state_dim, action_dim):
    """Pad / fuse / cast raw f32 params into the kernel layout."""
    s_pad = _round_up(max(state_dim, 1), 128)
    head_pad = _round_up(2 * action_dim, 128)

    w1 = jnp.zeros((s_pad, HIDDEN), jnp.bfloat16)
    w1 = w1.at[:state_dim, :].set(raw["w1"].astype(jnp.bfloat16))
    b1 = raw["b1"].astype(jnp.float32).reshape(1, HIDDEN)

    w2 = raw["w2"].astype(jnp.bfloat16)
    b2 = raw["b2"].astype(jnp.float32).reshape(1, HIDDEN)

    # fused head weights: [ w3 | w4 | zeros ]  -> (256, head_pad), exactly-zero padding
    wh = jnp.zeros((HIDDEN, head_pad), jnp.bfloat16)
    wh = wh.at[:, :action_dim].set(raw["w3"].astype(jnp.bfloat16))
    wh = wh.at[:, action_dim:2 * action_dim].set(raw["w4"].astype(jnp.bfloat16))
    bh = jnp.zeros((1, head_pad), jnp.float32)
    bh = bh.at[:, :action_dim].set(raw["b3"].reshape(1, -1).astype(jnp.float32))
    bh = bh.at[:, action_dim:2 * action_dim].set(raw["b4"].reshape(1, -1).astype(jnp.float32))

    return {"w1": w1, "b1": b1, "w2": w2, "b2": b2, "wh": wh, "bh": bh,
            "state_dim": state_dim, "action_dim": action_dim,
            "s_pad": s_pad, "head_pad": head_pad}


def actor_forward(state, prep, *, block_b=256):
    """state: (B, state_dim) f32.  Returns (mu, std), each (B, action_dim) f32."""
    B, S = state.shape
    A = prep["action_dim"]
    s_pad = prep["s_pad"]
    head_pad = prep["head_pad"]

    # batch tile: multiple of 8 sublanes, capped by block_b
    tb = _round_up(min(block_b, _round_up(B, 8)), 8)
    b_pad = _round_up(B, tb)

    state_p = jnp.zeros((b_pad, s_pad), jnp.float32)
    state_p = state_p.at[:B, :S].set(state.astype(jnp.float32))

    grid = (b_pad // tb,)

    def const_spec(shape):
        return pl.BlockSpec(shape, lambda i: (0, 0))   # VMEM-resident across grid

    out = pl.pallas_call(
        functools.partial(actor_kernel, action_dim=A),
        out_shape=jax.ShapeDtypeStruct((b_pad, head_pad), jnp.float32),
        grid=grid,
        in_specs=[
            pl.BlockSpec((tb, s_pad), lambda i: (i, 0)),   # state tile
            const_spec((s_pad, HIDDEN)), const_spec((1, HIDDEN)),      # l1
            const_spec((HIDDEN, HIDDEN)), const_spec((1, HIDDEN)),     # l2
            const_spec((HIDDEN, head_pad)), const_spec((1, head_pad)),  # fused heads
        ],
        out_specs=pl.BlockSpec((tb, head_pad), lambda i: (i, 0)),
        compiler_params=pltpu.CompilerParams(
            dimension_semantics=("parallel",)),            # shards batch over 2 TCs on v7x
    )(state_p,
      prep["w1"], prep["b1"],
      prep["w2"], prep["b2"],
      prep["wh"], prep["bh"])

    mu = out[:B, :A]
    std = out[:B, A:2 * A]
    return mu, std


# ---------------------------------------------------------------------------
# Plain-JAX reference (mirrors kernel precision: bf16 dot inputs, f32 accum)
# ---------------------------------------------------------------------------
def actor_reference(state, prep):
    A = prep["action_dim"]
    S = prep["state_dim"]
    s_pad = prep["s_pad"]
    x = jnp.zeros((state.shape[0], s_pad), jnp.float32).at[:, :S].set(state)
    x = x.astype(jnp.bfloat16)
    h1 = jnp.maximum(jnp.dot(x, prep["w1"], preferred_element_type=jnp.float32) + prep["b1"], 0.0)
    h1 = h1.astype(jnp.bfloat16)
    h2 = jnp.maximum(jnp.dot(h1, prep["w2"], preferred_element_type=jnp.float32) + prep["b2"], 0.0)
    h2 = h2.astype(jnp.bfloat16)
    head = jnp.dot(h2, prep["wh"], preferred_element_type=jnp.float32) + prep["bh"]
    mu = head[:, :A]
    log_std = jnp.minimum(jnp.maximum(head[:, A:2 * A], 0.0), LOG_STD_MAX)
    return mu, jnp.exp(log_std)


if __name__ == "__main__":
    key = jax.random.PRNGKey(0)
    k_state, k_params, k_state2 = jax.random.split(key, 3)

    batch = 2
    state_dim = 8
    action_dim = 4

    raw = init_actor_params(k_params, state_dim, action_dim)
    prep = prepare_actor_params(raw, state_dim, action_dim)

    # --- small batch (single grid tile, padded batch) ---
    state = jax.random.normal(k_state, (batch, state_dim), jnp.float32)
    mu, std = jax.block_until_ready(actor_forward(state, prep))
    mu_ref, std_ref = actor_reference(state, prep)
    assert mu.shape == (batch, action_dim) and std.shape == (batch, action_dim)
    assert jnp.allclose(mu, mu_ref, atol=1e-2, rtol=1e-2)
    assert jnp.allclose(std, std_ref, atol=1e-2, rtol=1e-2)
    assert bool(jnp.all(std > 0.0))

    # --- slightly larger batch with multiple grid tiles (exercises pipelining) ---
    state2 = jax.random.normal(k_state2, (20, state_dim), jnp.float32)
    mu2, std2 = jax.block_until_ready(actor_forward(state2, prep, block_b=8))
    mu2_ref, std2_ref = actor_reference(state2, prep)
    assert mu2.shape == (20, action_dim) and std2.shape == (20, action_dim)
    assert jnp.allclose(mu2, mu2_ref, atol=1e-2, rtol=1e-2)
    assert jnp.allclose(std2, std2_ref, atol=1e-2, rtol=1e-2)

    print("KERNEL_OK")
</pallas_src>

<mosaic_0001>
module attributes {stable_mosaic.version = 11 : i64} {
  func.func @actor_kernel(%arg0: i32, %arg1: memref<8x128xf32, #tpu.memory_space<vmem>>, %arg2: memref<128x256xbf16, #tpu.memory_space<vmem>>, %arg3: memref<1x256xf32, #tpu.memory_space<vmem>>, %arg4: memref<256x256xbf16, #tpu.memory_space<vmem>>, %arg5: memref<1x256xf32, #tpu.memory_space<vmem>>, %arg6: memref<256x128xbf16, #tpu.memory_space<vmem>>, %arg7: memref<1x128xf32, #tpu.memory_space<vmem>>, %arg8: memref<8x128xf32, #tpu.memory_space<vmem>>) attributes {dimension_semantics = [#tpu.dimension_semantics<parallel>], iteration_bounds = array<i64: 1>, scalar_prefetch = 0 : i64, scratch_operands = 0 : i64, tpu.core_type = #tpu.core_type<tc>, window_params = [{transform_indices = @transform_0, window_bounds = array<i64: 8, 128>}, {pipeline_mode = #tpu.pipeline_mode<synchronous>, transform_indices = @transform_1, window_bounds = array<i64: 128, 256>}, {pipeline_mode = #tpu.pipeline_mode<synchronous>, transform_indices = @transform_2, window_bounds = array<i64: 1, 256>}, {pipeline_mode = #tpu.pipeline_mode<synchronous>, transform_indices = @transform_3, window_bounds = array<i64: 256, 256>}, {pipeline_mode = #tpu.pipeline_mode<synchronous>, transform_indices = @transform_4, window_bounds = array<i64: 1, 256>}, {pipeline_mode = #tpu.pipeline_mode<synchronous>, transform_indices = @transform_5, window_bounds = array<i64: 256, 128>}, {pipeline_mode = #tpu.pipeline_mode<synchronous>, transform_indices = @transform_6, window_bounds = array<i64: 1, 128>}, {transform_indices = @transform_7, window_bounds = array<i64: 8, 128>}]} {
    %c0 = arith.constant 0 : index
    %c0_0 = arith.constant 0 : index
    %0 = vector.load %arg1[%c0, %c0_0] : memref<8x128xf32, #tpu.memory_space<vmem>>, vector<8x128xf32>
    %1 = arith.truncf %0 : vector<8x128xf32> to vector<8x128xbf16>
    %c0_1 = arith.constant 0 : index
    %c0_2 = arith.constant 0 : index
    %2 = vector.load %arg2[%c0_1, %c0_2] : memref<128x256xbf16, #tpu.memory_space<vmem>>, vector<128x256xbf16>
    %cst = arith.constant dense<0.000000e+00> : vector<8x256xf32>
    %3 = tpu.matmul %1, %2, %cst {dimension_numbers = #tpu.dot_dimension_numbers<[1], [0], [0], [1], [0, 0, 1, 1], [], []>} : vector<8x128xbf16>, vector<128x256xbf16>, vector<8x256xf32> -> vector<8x256xf32>
    %c0_3 = arith.constant 0 : index
    %c0_4 = arith.constant 0 : index
    %4 = vector.load %arg3[%c0_3, %c0_4] : memref<1x256xf32, #tpu.memory_space<vmem>>, vector<1x256xf32>
    %5 = vector.broadcast %4 : vector<1x256xf32> to vector<8x256xf32>
    %6 = arith.addf %3, %5 : vector<8x256xf32>
    %cst_5 = arith.constant 0.000000e+00 : f32
    %7 = vector.broadcast %cst_5 : f32 to vector<8x256xf32>
    %8 = arith.maximumf %6, %7 : vector<8x256xf32>
    %9 = arith.truncf %8 : vector<8x256xf32> to vector<8x256xbf16>
    %c0_6 = arith.constant 0 : index
    %c0_7 = arith.constant 0 : index
    %10 = vector.load %arg4[%c0_6, %c0_7] : memref<256x256xbf16, #tpu.memory_space<vmem>>, vector<256x256xbf16>
    %cst_8 = arith.constant dense<0.000000e+00> : vector<8x256xf32>
    %11 = tpu.matmul %9, %10, %cst_8 {dimension_numbers = #tpu.dot_dimension_numbers<[1], [0], [0], [1], [0, 0, 1, 1], [], []>} : vector<8x256xbf16>, vector<256x256xbf16>, vector<8x256xf32> -> vector<8x256xf32>
    %c0_9 = arith.constant 0 : index
    %c0_10 = arith.constant 0 : index
    %12 = vector.load %arg5[%c0_9, %c0_10] : memref<1x256xf32, #tpu.memory_space<vmem>>, vector<1x256xf32>
    %13 = vector.broadcast %12 : vector<1x256xf32> to vector<8x256xf32>
    %14 = arith.addf %11, %13 : vector<8x256xf32>
    %cst_11 = arith.constant 0.000000e+00 : f32
    %15 = vector.broadcast %cst_11 : f32 to vector<8x256xf32>
    %16 = arith.maximumf %14, %15 : vector<8x256xf32>
    %17 = arith.truncf %16 : vector<8x256xf32> to vector<8x256xbf16>
    %c0_12 = arith.constant 0 : index
    %c0_13 = arith.constant 0 : index
    %18 = vector.load %arg6[%c0_12, %c0_13] : memref<256x128xbf16, #tpu.memory_space<vmem>>, vector<256x128xbf16>
    %cst_14 = arith.constant dense<0.000000e+00> : vector<8x128xf32>
    %19 = tpu.matmul %17, %18, %cst_14 {dimension_numbers = #tpu.dot_dimension_numbers<[1], [0], [0], [1], [0, 0, 1, 1], [], []>} : vector<8x256xbf16>, vector<256x128xbf16>, vector<8x128xf32> -> vector<8x128xf32>
    %c0_15 = arith.constant 0 : index
    %c0_16 = arith.constant 0 : index
    %20 = vector.load %arg7[%c0_15, %c0_16] : memref<1x128xf32, #tpu.memory_space<vmem>>, vector<1x128xf32>
    %21 = vector.broadcast %20 : vector<1x128xf32> to vector<8x128xf32>
    %22 = arith.addf %19, %21 : vector<8x128xf32>
    %cst_17 = arith.constant 0.000000e+00 : f32
    %23 = vector.broadcast %cst_17 : f32 to vector<8x128xf32>
    %24 = arith.maximumf %22, %23 : vector<8x128xf32>
    %cst_18 = arith.constant 2.000000e+00 : f32
    %25 = vector.broadcast %cst_18 : f32 to vector<8x128xf32>
    %26 = arith.minimumf %24, %25 : vector<8x128xf32>
    %27 = math.exp %26 : vector<8x128xf32>
    %28 = tpu.iota {dimensions = array<i32: 1>} : vector<8x128xi32>
    %c4_i32 = arith.constant 4 : i32
    %29 = vector.broadcast %c4_i32 : i32 to vector<8x128xi32>
    %30 = arith.cmpi sge, %28, %29 : vector<8x128xi32>
    %31 = arith.select %30, %27, %22 : vector<8x128xi1>, vector<8x128xf32>
    %c0_19 = arith.constant 0 : index
    %c0_20 = arith.constant 0 : index
    %32 = vector.load %arg8[%c0_19, %c0_20] : memref<8x128xf32, #tpu.memory_space<vmem>>, vector<8x128xf32>
    tpu.vector_store %arg8[%c0_19, %c0_20], %31 {strides = array<i32>} : memref<8x128xf32, #tpu.memory_space<vmem>>, vector<8x128xf32>,
    return
  }
  func.func @transform_0(%arg0: i32) -> (i32, i32) {
    %c0_i32 = arith.constant 0 : i32
    %c0_i32_0 = arith.constant 0 : i32
    return %arg0, %c0_i32 : i32, i32
  }
  func.func @transform_1(%arg0: i32) -> (i32, i32) {
    %c0_i32 = arith.constant 0 : i32
    %c0_i32_0 = arith.constant 0 : i32
    %c0_i32_1 = arith.constant 0 : i32
    return %c0_i32, %c0_i32_0 : i32, i32
  }
  func.func @transform_2(%arg0: i32) -> (i32, i32) {
    %c0_i32 = arith.constant 0 : i32
    %c0_i32_0 = arith.constant 0 : i32
    %c0_i32_1 = arith.constant 0 : i32
    return %c0_i32, %c0_i32_0 : i32, i32
  }
  func.func @transform_3(%arg0: i32) -> (i32, i32) {
    %c0_i32 = arith.constant 0 : i32
    %c0_i32_0 = arith.constant 0 : i32
    %c0_i32_1 = arith.constant 0 : i32
    return %c0_i32, %c0_i32_0 : i32, i32
  }
  func.func @transform_4(%arg0: i32) -> (i32, i32) {
    %c0_i32 = arith.constant 0 : i32
    %c0_i32_0 = arith.constant 0 : i32
    %c0_i32_1 = arith.constant 0 : i32
    return %c0_i32, %c0_i32_0 : i32, i32
  }
  func.func @transform_5(%arg0: i32) -> (i32, i32) {
    %c0_i32 = arith.constant 0 : i32
    %c0_i32_0 = arith.constant 0 : i32
    %c0_i32_1 = arith.constant 0 : i32
    return %c0_i32, %c0_i32_0 : i32, i32
  }
  func.func @transform_6(%arg0: i32) -> (i32, i32) {
    %c0_i32 = arith.constant 0 : i32
    %c0_i32_0 = arith.constant 0 : i32
    %c0_i32_1 = arith.constant 0 : i32
    return %c0_i32, %c0_i32_0 : i32, i32
  }
  func.func @transform_7(%arg0: i32) -> (i32, i32) {
    %c0_i32 = arith.constant 0 : i32
    %c0_i32_0 = arith.constant 0 : i32
    return %arg0, %c0_i32 : i32, i32
  }
}

</mosaic_0001>

<llo_original>
// kernel: tpu_custom_call.1
$region0: #{tpu_custom_call.1}
  #allocation0 [shape = 'u32[]', space=smem, size = 0x4, offset = 0x4, fixed_abs, tag = 'smem constant byte address 0x4 - core index']
  #allocation1 [shape = 'u32[144,128]{1,0:T(1,128)}', space=vmem, size = 0x12000, scoped, tag = 'internal scratch']
  %s0 = inlined_call_operand.hbm [shape: f32[8,128], index: 0, kind: input, shape index: {}]
  %s1 = inlined_call_operand.hbm [shape: bf16[128,256], index: 1, kind: input, shape index: {}]
  %s2 = inlined_call_operand.vmem [shape: f32[1,256], index: 2, kind: input, shape index: {}]
  %s3 = inlined_call_operand.hbm [shape: bf16[256,256], index: 3, kind: input, shape index: {}]
  %s4 = inlined_call_operand.vmem [shape: f32[1,256], index: 4, kind: input, shape index: {}]
  %s5 = inlined_call_operand.hbm [shape: bf16[256,128], index: 5, kind: input, shape index: {}]
  %s6 = inlined_call_operand.vmem [shape: f32[1,128], index: 6, kind: input, shape index: {}]
  %s7 = inlined_call_operand.hbm [shape: f32[8,128], index: 7, kind: output, shape index: {}]
  %s8 = sld [smem:[#allocation0]]
  $region54: #{tpu_custom_call.1} parent=0
    _
  %s10 = ssub.s32 1, %s8
  %s11 = scalar_select 0, %s10, %s8
  $region1: #{tpu_custom_call.1} parent=0
    #allocation2 [shape = 'u8[4096]{0}', space=vmem, size = 0x1000, scoped, tag = 'input window, operand 0, single buffered']
    #allocation3 [shape = 's32[1]{0}', space=sflag, size = 0x4, scoped, tag = 'scoped memory for tpu_custom_call.1']
    #allocation4 [shape = 's32[1]{0}', space=sflag, size = 0x4, scoped, tag = 'scoped memory for tpu_custom_call.1']
    #allocation5 [shape = 'u8[65536]{0}', space=vmem, size = 0x10000, scoped, tag = 'input window, operand 1, single buffered']
    #allocation6 [shape = 's32[1]{0}', space=sflag, size = 0x4, scoped, tag = 'scoped memory for tpu_custom_call.1']
    #allocation7 [shape = 'u8[131072]{0}', space=vmem, size = 0x20000, scoped, tag = 'input window, operand 3, single buffered']
    #allocation8 [shape = 'u8[65536]{0}', space=vmem, size = 0x10000, scoped, tag = 'input window, operand 5, single buffered']
    #allocation9 [shape = 's32[1]{0}', space=sflag, size = 0x4, scoped, tag = 'scoped memory for tpu_custom_call.1']
    #allocation10 [shape = 'u8[4096]{0}', space=vmem, size = 0x1000, scoped, tag = 'output window, operand 0, single buffered']
    %12 = vsyncpa [#allocation3], 0
    %13 = vsyncpa [#allocation6], 0
    %14 = vsyncpa [#allocation9], 0
    %15 = vsyncpa [#allocation4], 0
    // Predicated region
    $region2: #{tpu_custom_call.1} parent=1 // pred_check
      _
    $region3: #{tpu_custom_call.1} parent=1 // pred_check_branch
      %17 = sbr.rel (0) target = $region5
    $region4: #{tpu_custom_call.1} parent=1 // pred_region
      %s19 = ssub.s32 128, 128
      %20 = vsyncadd [#allocation3], %s19
      %s22 = sshll.u32 [#allocation2], 4
      %s23 = int_to_ptr.vmem [resolvable:$true] %s22
      %25 = dma.hbm_to_vmem [thread:$0]  %s0, 128, %s23, [#allocation3]
    $region5: #{tpu_custom_call.1} parent=1 // pred_fallthru
      _
    // Predicated region
    $region6: #{tpu_custom_call.1} parent=1 // pred_check
      _
    $region7: #{tpu_custom_call.1} parent=1 // pred_check_branch
      %27 = sbr.rel (0) target = $region9
    $region8: #{tpu_custom_call.1} parent=1 // pred_region
      %s29 = ssub.s32 2048, 2048
      %30 = vsyncadd [#allocation6], %s29
      %s31 = sshll.u32 [#allocation5], 4
      %s32 = int_to_ptr.vmem [resolvable:$true] %s31
      %37 = dma.hbm_to_vmem [thread:$0]  %s1, 2048, %s32, [#allocation6], 128, 128, 8
    $region9: #{tpu_custom_call.1} parent=1 // pred_fallthru
      _
    // Predicated region
    $region10: #{tpu_custom_call.1} parent=1 // pred_check
      _
    $region11: #{tpu_custom_call.1} parent=1 // pred_check_branch
      %39 = sbr.rel (0) target = $region13
    $region12: #{tpu_custom_call.1} parent=1 // pred_region
      _
    $region13: #{tpu_custom_call.1} parent=1 // pred_fallthru
      _
    // Predicated region
    $region14: #{tpu_custom_call.1} parent=1 // pred_check
      _
    $region15: #{tpu_custom_call.1} parent=1 // pred_check_branch
      %41 = sbr.rel (0) target = $region17
    $region16: #{tpu_custom_call.1} parent=1 // pred_region
      %s43 = ssub.s32 4096, 4096
      %44 = vsyncadd [#allocation6], %s43
      %s45 = sshll.u32 [#allocation7], 4
      %s46 = int_to_ptr.vmem [resolvable:$true] %s45
      %51 = dma.hbm_to_vmem [thread:$0]  %s3, 4096, %s46, [#allocation6], 128, 128, 8
    $region17: #{tpu_custom_call.1} parent=1 // pred_fallthru
      _
    // Predicated region
    $region18: #{tpu_custom_call.1} parent=1 // pred_check
      _
    $region19: #{tpu_custom_call.1} parent=1 // pred_check_branch
      %53 = sbr.rel (0) target = $region21
    $region20: #{tpu_custom_call.1} parent=1 // pred_region
      _
    $region21: #{tpu_custom_call.1} parent=1 // pred_fallthru
      _
    // Predicated region
    $region22: #{tpu_custom_call.1} parent=1 // pred_check
      _
    $region23: #{tpu_custom_call.1} parent=1 // pred_check_branch
      %55 = sbr.rel (0) target = $region25
    $region24: #{tpu_custom_call.1} parent=1 // pred_region
      %s57 = ssub.s32 2048, 2048
      %58 = vsyncadd [#allocation9], %s57
      %s59 = sshll.u32 [#allocation8], 4
      %s60 = int_to_ptr.vmem [resolvable:$true] %s59
      %65 = dma.hbm_to_vmem [thread:$0]  %s5, 2048, %s60, [#allocation9], 64, 64, 4
    $region25: #{tpu_custom_call.1} parent=1 // pred_fallthru
      _
    // Predicated region
    $region26: #{tpu_custom_call.1} parent=1 // pred_check
      _
    $region27: #{tpu_custom_call.1} parent=1 // pred_check_branch
      %67 = sbr.rel (0) target = $region29
    $region28: #{tpu_custom_call.1} parent=1 // pred_region
      _
    $region29: #{tpu_custom_call.1} parent=1 // pred_fallthru
      _
    // Predicated region
    $region30: #{tpu_custom_call.1} parent=1 // pred_check
      _
    $region31: #{tpu_custom_call.1} parent=1 // pred_check_branch
      %69 = sbr.rel (0) target = $region33
    $region32: #{tpu_custom_call.1} parent=1 // pred_region
      %70 = dma.done [#allocation3], 128
    $region33: #{tpu_custom_call.1} parent=1 // pred_fallthru
      _
    // Predicated region
    $region34: #{tpu_custom_call.1} parent=1 // pred_check
      _
    $region35: #{tpu_custom_call.1} parent=1 // pred_check_branch
      %72 = sbr.rel (0) target = $region37
    $region36: #{tpu_custom_call.1} parent=1 // pred_region
      %73 = dma.done [#allocation6], 2048
    $region37: #{tpu_custom_call.1} parent=1 // pred_fallthru
      _
    // Predicated region
    $region38: #{tpu_custom_call.1} parent=1 // pred_check
      _
    $region39: #{tpu_custom_call.1} parent=1 // pred_check_branch
      %75 = sbr.rel (0) target = $region41
    $region40: #{tpu_custom_call.1} parent=1 // pred_region
      %76 = dma.done [#allocation6], 4096
    $region41: #{tpu_custom_call.1} parent=1 // pred_fallthru
      _
    // Predicated region
    $region42: #{tpu_custom_call.1} parent=1 // pred_check
      _
    $region43: #{tpu_custom_call.1} parent=1 // pred_check_branch
      %78 = sbr.rel (0) target = $region45
    $region44: #{tpu_custom_call.1} parent=1 // pred_region
      %79 = dma.done [#allocation9], 2048
    $region45: #{tpu_custom_call.1} parent=1 // pred_fallthru
      _
    %v81 = vld [vmem:[#allocation2] sm:$0xff]
    %v82 = vpack.c.bf16 %v81, %v81
    %v83 = vld [vmem:[#allocation5] sm:$0xff]
    %v84 = vld [vmem:[#allocation5 + $0x8] sm:$0xff]
    %v85 = vld [vmem:[#allocation5 + $0x10] sm:$0xff]
    %v86 = vld [vmem:[#allocation5 + $0x18] sm:$0xff]
    %v87 = vld [vmem:[#allocation5 + $0x20] sm:$0xff]
    %v88 = vld [vmem:[#allocation5 + $0x28] sm:$0xff]
    %v89 = vld [vmem:[#allocation5 + $0x30] sm:$0xff]
    %v90 = vld [vmem:[#allocation5 + $0x38] sm:$0xff]
    %v91 = vld [vmem:[#allocation5 + $0x40] sm:$0xff]
    %v92 = vld [vmem:[#allocation5 + $0x48] sm:$0xff]
    %v93 = vld [vmem:[#allocation5 + $0x50] sm:$0xff]
    %v94 = vld [vmem:[#allocation5 + $0x58] sm:$0xff]
    %v95 = vld [vmem:[#allocation5 + $0x60] sm:$0xff]
    %v96 = vld [vmem:[#allocation5 + $0x68] sm:$0xff]
    %v97 = vld [vmem:[#allocation5 + $0x70] sm:$0xff]
    %v98 = vld [vmem:[#allocation5 + $0x78] sm:$0xff]
    %v99 = vld [vmem:[%s2] sm:$0x3]
    %v101 = vlaneseq
    %v102 = vshrl.u32 %v101, 7
    %v103 = vsub.s32 0, %v102
    %v104 = vrot.slane %v99, %v103
    %v105 = vlaneseq
    %v106 = vshrl.u32 %v105, 7
    %v107 = vsub.s32 1, %v106
    %v108 = vrot.slane %v99, %v107
    %v127 = vunpack.c.l.b16 %v83
    %v128 = vunpack.c.h.b16 %v83
    %v129 = vunpack.c.l.b16 %v84
    %v130 = vunpack.c.h.b16 %v84
    %v131 = vunpack.c.l.b16 %v85
    %v132 = vunpack.c.h.b16 %v85
    %v133 = vunpack.c.l.b16 %v86
    %v134 = vunpack.c.h.b16 %v86
    %v135 = vunpack.c.l.b16 %v87
    %v136 = vunpack.c.h.b16 %v87
    %v137 = vunpack.c.l.b16 %v88
    %v138 = vunpack.c.h.b16 %v88
    %v139 = vunpack.c.l.b16 %v89
    %v140 = vunpack.c.h.b16 %v89
    %v141 = vunpack.c.l.b16 %v90
    %v142 = vunpack.c.h.b16 %v90
    %v143 = vunpack.c.l.b16 %v91
    %v144 = vunpack.c.h.b16 %v91
    %v145 = vunpack.c.l.b16 %v92
    %v146 = vunpack.c.h.b16 %v92
    %v147 = vunpack.c.l.b16 %v93
    %v148 = vunpack.c.h.b16 %v93
    %v149 = vunpack.c.l.b16 %v94
    %v150 = vunpack.c.h.b16 %v94
    %v151 = vunpack.c.l.b16 %v95
    %v152 = vunpack.c.h.b16 %v95
    %v153 = vunpack.c.l.b16 %v96
    %v154 = vunpack.c.h.b16 %v96
    %v155 = vunpack.c.l.b16 %v97
    %v156 = vunpack.c.h.b16 %v97
    %v157 = vunpack.c.l.b16 %v98
    %v158 = vunpack.c.h.b16 %v98
    %v159 = vpack.c.b16 %v129, %v127
    %v160 = vpack.c.b16 %v130, %v128
    %v161 = vpack.c.b16 %v133, %v131
    %v162 = vpack.c.b16 %v134, %v132
    %v163 = vpack.c.b16 %v137, %v135
    %v164 = vpack.c.b16 %v138, %v136
    %v165 = vpack.c.b16 %v141, %v139
    %v166 = vpack.c.b16 %v142, %v140
    %v167 = vpack.c.b16 %v145, %v143
    %v168 = vpack.c.b16 %v146, %v144
    %v169 = vpack.c.b16 %v149, %v147
    %v170 = vpack.c.b16 %v150, %v148
    %v171 = vpack.c.b16 %v153, %v151
    %v172 = vpack.c.b16 %v154, %v152
    %v173 = vpack.c.b16 %v157, %v155
    %v174 = vpack.c.b16 %v158, %v156
    %191 = vmatprep.subr.bf16.mxu0 %v174
    %192 = vmatpush1.bf16.msra.mxu0 %v173
    %193 = vmatprep.subr.bf16.mxu0 %v172
    %194 = vmatpush1.bf16.msra.mxu0 %v171
    %195 = vmatprep.subr.bf16.mxu0 %v170
    %196 = vmatpush1.bf16.msra.mxu0 %v169
    %197 = vmatprep.subr.bf16.mxu0 %v168
    %198 = vmatpush1.bf16.msra.mxu0 %v167
    %199 = vmatprep.subr.bf16.mxu0 %v166
    %200 = vmatpush1.bf16.msra.mxu0 %v165
    %201 = vmatprep.subr.bf16.mxu0 %v164
    %202 = vmatpush1.bf16.msra.mxu0 %v163
    %203 = vmatprep.subr.bf16.mxu0 %v162
    %204 = vmatpush1.bf16.msra.mxu0 %v161
    %205 = vmatprep.subr.bf16.mxu0 %v160
    %206 = vmatpush1.bf16.msra.mxu0 %v159
    %207 = vmatprep.subr.bf16.mxu0 0
    %208 = vmatpush2.bf16.msra.mxu0 0
    %209 = vmatprep.subr.bf16.mxu0 0
    %210 = vmatpush2.bf16.msra.mxu0 0
    %211 = vmatprep.subr.bf16.mxu0 0
    %212 = vmatpush2.bf16.msra.mxu0 0
    %213 = vmatprep.subr.bf16.mxu0 0
    %214 = vmatpush2.bf16.msra.mxu0 0
    %215 = vmatprep.subr.bf16.mxu0 0
    %216 = vmatpush2.bf16.msra.mxu0 0
    %217 = vmatprep.subr.bf16.mxu0 0
    %218 = vmatpush2.bf16.msra.mxu0 0
    %219 = vmatprep.subr.bf16.mxu0 0
    %220 = vmatpush2.bf16.msra.mxu0 0
    %221 = vmatprep.subr.bf16.mxu0 0
    %222 = vmatpush2.bf16.msra.mxu0 0
    %223 = vmatprep.mubr.bf16.mxu0 0
    %224 = vmatmul.mubr.bf16.gmra.mxu0 %v82
    %v225 = vpop.f32.mrf.mxu0
    %v226 = vadd.f32 %v104, %v225
    %v227 = vpop.f32.mrf.mxu0
    %v228 = vadd.f32 %v108, %v227
    %v229 = vpop.f32.mrf.mxu0
    %v230 = vpop.f32.mrf.mxu0
    %231 = vdwg.mxu0
    %v232 = vmax.f32 %v226, 0.0
    %v233 = vmax.f32 %v228, 0.0
    %v234 = vpack.c.bf16 %v232, %v232
    %v235 = vpack.c.bf16 %v233, %v233
    %v236 = vld [vmem:[#allocation7] sm:$0xff]
    %v237 = vld [vmem:[#allocation7 + $0x8] sm:$0xff]
    %v238 = vld [vmem:[#allocation7 + $0x10] sm:$0xff]
    %v239 = vld [vmem:[#allocation7 + $0x18] sm:$0xff]
    %v240 = vld [vmem:[#allocation7 + $0x20] sm:$0xff]
    %v241 = vld [vmem:[#allocation7 + $0x28] sm:$0xff]
    %v242 = vld [vmem:[#allocation7 + $0x30] sm:$0xff]
    %v243 = vld [vmem:[#allocation7 + $0x38] sm:$0xff]
    %v244 = vld [vmem:[#allocation7 + $0x40] sm:$0xff]
    %v245 = vld [vmem:[#allocation7 + $0x48] sm:$0xff]
    %v246 = vld [vmem:[#allocation7 + $0x50] sm:$0xff]
    %v247 = vld [vmem:[#allocation7 + $0x58] sm:$0xff]
    %v248 = vld [vmem:[#allocation7 + $0x60] sm:$0xff]
    %v249 = vld [vmem:[#allocation7 + $0x68] sm:$0xff]
    %v250 = vld [vmem:[#allocation7 + $0x70] sm:$0xff]
    %v251 = vld [vmem:[#allocation7 + $0x78] sm:$0xff]
    %v252 = vld [vmem:[#allocation7 + $0x80] sm:$0xff]
    %v253 = vld [vmem:[#allocation7 + $0x88] sm:$0xff]
    %v254 = vld [vmem:[#allocation7 + $0x90] sm:$0xff]
    %v255 = vld [vmem:[#allocation7 + $0x98] sm:$0xff]
    %v256 = vld [vmem:[#allocation7 + $0xa0] sm:$0xff]
    %v257 = vld [vmem:[#allocation7 + $0xa8] sm:$0xff]
    %v258 = vld [vmem:[#allocation7 + $0xb0] sm:$0xff]
    %v259 = vld [vmem:[#allocation7 + $0xb8] sm:$0xff]
    %v260 = vld [vmem:[#allocation7 + $0xc0] sm:$0xff]
    %v261 = vld [vmem:[#allocation7 + $0xc8] sm:$0xff]
    %v262 = vld [vmem:[#allocation7 + $0xd0] sm:$0xff]
    %v263 = vld [vmem:[#allocation7 + $0xd8] sm:$0xff]
    %v264 = vld [vmem:[#allocation7 + $0xe0] sm:$0xff]
    %v265 = vld [vmem:[#allocation7 + $0xe8] sm:$0xff]
    %v266 = vld [vmem:[#allocation7 + $0xf0] sm:$0xff]
    %v267 = vld [vmem:[#allocation7 + $0xf8] sm:$0xff]
    %v268 = vld [vmem:[%s4] sm:$0x3]
    %v270 = vlaneseq
    %v271 = vshrl.u32 %v270, 7
    %v272 = vsub.s32 0, %v271
    %v273 = vrot.slane %v268, %v272
    %v274 = vlaneseq
    %v275 = vshrl.u32 %v274, 7
    %v276 = vsub.s32 1, %v275
    %v277 = vrot.slane %v268, %v276
    %v312 = vunpack.c.l.b16 %v236
    %v313 = vunpack.c.h.b16 %v236
    %v314 = vunpack.c.l.b16 %v237
    %v315 = vunpack.c.h.b16 %v237
    %v316 = vunpack.c.l.b16 %v238
    %v317 = vunpack.c.h.b16 %v238
    %v318 = vunpack.c.l.b16 %v239
    %v319 = vunpack.c.h.b16 %v239
    %v320 = vunpack.c.l.b16 %v240
    %v321 = vunpack.c.h.b16 %v240
    %v322 = vunpack.c.l.b16 %v241
    %v323 = vunpack.c.h.b16 %v241
    %v324 = vunpack.c.l.b16 %v242
    %v325 = vunpack.c.h.b16 %v242
    %v326 = vunpack.c.l.b16 %v243
    %v327 = vunpack.c.h.b16 %v243
    %v328 = vunpack.c.l.b16 %v244
    %v329 = vunpack.c.h.b16 %v244
    %v330 = vunpack.c.l.b16 %v245
    %v331 = vunpack.c.h.b16 %v245
    %v332 = vunpack.c.l.b16 %v246
    %v333 = vunpack.c.h.b16 %v246
    %v334 = vunpack.c.l.b16 %v247
    %v335 = vunpack.c.h.b16 %v247
    %v336 = vunpack.c.l.b16 %v248
    %v337 = vunpack.c.h.b16 %v248
    %v338 = vunpack.c.l.b16 %v249
    %v339 = vunpack.c.h.b16 %v249
    %v340 = vunpack.c.l.b16 %v250
    %v341 = vunpack.c.h.b16 %v250
    %v342 = vunpack.c.l.b16 %v251
    %v343 = vunpack.c.h.b16 %v251
    %v344 = vunpack.c.l.b16 %v252
    %v345 = vunpack.c.h.b16 %v252
    %v346 = vunpack.c.l.b16 %v253
    %v347 = vunpack.c.h.b16 %v253
    %v348 = vunpack.c.l.b16 %v254
    %v349 = vunpack.c.h.b16 %v254
    %v350 = vunpack.c.l.b16 %v255
    %v351 = vunpack.c.h.b16 %v255
    %v352 = vunpack.c.l.b16 %v256
    %v353 = vunpack.c.h.b16 %v256
    %v354 = vunpack.c.l.b16 %v257
    %v355 = vunpack.c.h.b16 %v257
    %v356 = vunpack.c.l.b16 %v258
    %v357 = vunpack.c.h.b16 %v258
    %v358 = vunpack.c.l.b16 %v259
    %v359 = vunpack.c.h.b16 %v259
    %v360 = vunpack.c.l.b16 %v260
    %v361 = vunpack.c.h.b16 %v260
    %v362 = vunpack.c.l.b16 %v261
    %v363 = vunpack.c.h.b16 %v261
    %v364 = vunpack.c.l.b16 %v262
    %v365 = vunpack.c.h.b16 %v262
    %v366 = vunpack.c.l.b16 %v263
    %v367 = vunpack.c.h.b16 %v263
    %v368 = vunpack.c.l.b16 %v264
    %v369 = vunpack.c.h.b16 %v264
    %v370 = vunpack.c.l.b16 %v265
    %v371 = vunpack.c.h.b16 %v265
    %v372 = vunpack.c.l.b16 %v266
    %v373 = vunpack.c.h.b16 %v266
    %v374 = vunpack.c.l.b16 %v267
    %v375 = vunpack.c.h.b16 %v267
    %v376 = vpack.c.b16 %v314, %v312
    %v377 = vpack.c.b16 %v315, %v313
    %v378 = vpack.c.b16 %v318, %v316
    %v379 = vpack.c.b16 %v319, %v317
    %v380 = vpack.c.b16 %v322, %v320
    %v381 = vpack.c.b16 %v323, %v321
    %v382 = vpack.c.b16 %v326, %v324
    %v383 = vpack.c.b16 %v327, %v325
    %v384 = vpack.c.b16 %v330, %v328
    %v385 = vpack.c.b16 %v331, %v329
    %v386 = vpack.c.b16 %v334, %v332
    %v387 = vpack.c.b16 %v335, %v333
    %v388 = vpack.c.b16 %v338, %v336
    %v389 = vpack.c.b16 %v339, %v337
    %v390 = vpack.c.b16 %v342, %v340
    %v391 = vpack.c.b16 %v343, %v341
    %v392 = vpack.c.b16 %v346, %v344
    %v393 = vpack.c.b16 %v347, %v345
    %v394 = vpack.c.b16 %v350, %v348
    %v395 = vpack.c.b16 %v351, %v349
    %v396 = vpack.c.b16 %v354, %v352
    %v397 = vpack.c.b16 %v355, %v353
    %v398 = vpack.c.b16 %v358, %v356
    %v399 = vpack.c.b16 %v359, %v357
    %v400 = vpack.c.b16 %v362, %v360
    %v401 = vpack.c.b16 %v363, %v361
    %v402 = vpack.c.b16 %v366, %v364
    %v403 = vpack.c.b16 %v367, %v365
    %v404 = vpack.c.b16 %v370, %v368
    %v405 = vpack.c.b16 %v371, %v369
    %v406 = vpack.c.b16 %v374, %v372
    %v407 = vpack.c.b16 %v375, %v373
    %440 = vmatprep.subr.bf16.mxu0 %v391
    %441 = vmatpush1.bf16.msra.mxu0 %v390
    %442 = vmatprep.subr.bf16.mxu0 %v389
    %443 = vmatpush1.bf16.msra.mxu0 %v388
    %444 = vmatprep.subr.bf16.mxu0 %v387
    %445 = vmatpush1.bf16.msra.mxu0 %v386
    %446 = vmatprep.subr.bf16.mxu0 %v385
    %447 = vmatpush1.bf16.msra.mxu0 %v384
    %448 = vmatprep.subr.bf16.mxu0 %v383
    %449 = vmatpush1.bf16.msra.mxu0 %v382
    %450 = vmatprep.subr.bf16.mxu0 %v381
    %451 = vmatpush1.bf16.msra.mxu0 %v380
    %452 = vmatprep.subr.bf16.mxu0 %v379
    %453 = vmatpush1.bf16.msra.mxu0 %v378
    %454 = vmatprep.subr.bf16.mxu0 %v377
    %455 = vmatpush1.bf16.msra.mxu0 %v376
    %456 = vmatprep.subr.bf16.mxu0 %v407
    %457 = vmatpush2.bf16.msra.mxu0 %v406
    %458 = vmatprep.subr.bf16.mxu0 %v405
    %459 = vmatpush2.bf16.msra.mxu0 %v404
    %460 = vmatprep.subr.bf16.mxu0 %v403
    %461 = vmatpush2.bf16.msra.mxu0 %v402
    %462 = vmatprep.subr.bf16.mxu0 %v401
    %463 = vmatpush2.bf16.msra.mxu0 %v400
    %464 = vmatprep.subr.bf16.mxu0 %v399
    %465 = vmatpush2.bf16.msra.mxu0 %v398
    %466 = vmatprep.subr.bf16.mxu0 %v397
    %467 = vmatpush2.bf16.msra.mxu0 %v396
    %468 = vmatprep.subr.bf16.mxu0 %v395
    %469 = vmatpush2.bf16.msra.mxu0 %v394
    %470 = vmatprep.subr.bf16.mxu0 %v393
    %471 = vmatpush2.bf16.msra.mxu0 %v392
    %472 = vmatprep.mubr.bf16.mxu0 %v235
    %473 = vmatmul.mubr.bf16.gmra.mxu0 %v234
    %v474 = vpop.f32.mrf.mxu0
    %v475 = vadd.f32 %v273, %v474
    %v476 = vpop.f32.mrf.mxu0
    %v477 = vadd.f32 %v277, %v476
    %v478 = vpop.f32.mrf.mxu0
    %v479 = vpop.f32.mrf.mxu0
    %480 = vdwg.mxu0
    %v481 = vmax.f32 %v475, 0.0
    %v482 = vmax.f32 %v477, 0.0
    %v483 = vpack.c.bf16 %v481, %v481
    %v484 = vpack.c.bf16 %v482, %v482
    %v485 = vld [vmem:[#allocation8] sm:$0xf]
    %v486 = vld [vmem:[#allocation8 + $0x4] sm:$0xf]
    %v487 = vld [vmem:[#allocation8 + $0x8] sm:$0xf]
    %v488 = vld [vmem:[#allocation8 + $0xc] sm:$0xf]
    %v489 = vld [vmem:[#allocation8 + $0x10] sm:$0xf]
    %v490 = vld [vmem:[#allocation8 + $0x14] sm:$0xf]
    %v491 = vld [vmem:[#allocation8 + $0x18] sm:$0xf]
    %v492 = vld [vmem:[#allocation8 + $0x1c] sm:$0xf]
    %v493 = vld [vmem:[#allocation8 + $0x20] sm:$0xf]
    %v494 = vld [vmem:[#allocation8 + $0x24] sm:$0xf]
    %v495 = vld [vmem:[#allocation8 + $0x28] sm:$0xf]
    %v496 = vld [vmem:[#allocation8 + $0x2c] sm:$0xf]
    %v497 = vld [vmem:[#allocation8 + $0x30] sm:$0xf]
    %v498 = vld [vmem:[#allocation8 + $0x34] sm:$0xf]
    %v499 = vld [vmem:[#allocation8 + $0x38] sm:$0xf]
    %v500 = vld [vmem:[#allocation8 + $0x3c] sm:$0xf]
    %v501 = vld [vmem:[#allocation8 + $0x40] sm:$0xf]
    %v502 = vld [vmem:[#allocation8 + $0x44] sm:$0xf]
    %v503 = vld [vmem:[#allocation8 + $0x48] sm:$0xf]
    %v504 = vld [vmem:[#allocation8 + $0x4c] sm:$0xf]
    %v505 = vld [vmem:[#allocation8 + $0x50] sm:$0xf]
    %v506 = vld [vmem:[#allocation8 + $0x54] sm:$0xf]
    %v507 = vld [vmem:[#allocation8 + $0x58] sm:$0xf]
    %v508 = vld [vmem:[#allocation8 + $0x5c] sm:$0xf]
    %v509 = vld [vmem:[#allocation8 + $0x60] sm:$0xf]
    %v510 = vld [vmem:[#allocation8 + $0x64] sm:$0xf]
    %v511 = vld [vmem:[#allocation8 + $0x68] sm:$0xf]
    %v512 = vld [vmem:[#allocation8 + $0x6c] sm:$0xf]
    %v513 = vld [vmem:[#allocation8 + $0x70] sm:$0xf]
    %v514 = vld [vmem:[#allocation8 + $0x74] sm:$0xf]
    %v515 = vld [vmem:[#allocation8 + $0x78] sm:$0xf]
    %v516 = vld [vmem:[#allocation8 + $0x7c] sm:$0xf]
    %v517 = vld [vmem:[%s6] sm:$0x1]
    %v519 = vlaneseq
    %v520 = vshrl.u32 %v519, 7
    %v521 = vsub.s32 0, %v520
    %v522 = vrot.slane %v517, %v521
    %v556 = vunpack.c.l.b16 %v485
    %v557 = vunpack.c.l.b16 %v486
    %v558 = vunpack.c.l.b16 %v487
    %v559 = vunpack.c.l.b16 %v488
    %v560 = vunpack.c.l.b16 %v489
    %v561 = vunpack.c.l.b16 %v490
    %v562 = vunpack.c.l.b16 %v491
    %v563 = vunpack.c.l.b16 %v492
    %v564 = vunpack.c.l.b16 %v493
    %v565 = vunpack.c.l.b16 %v494
    %v566 = vunpack.c.l.b16 %v495
    %v567 = vunpack.c.l.b16 %v496
    %v568 = vunpack.c.l.b16 %v497
    %v569 = vunpack.c.l.b16 %v498
    %v570 = vunpack.c.l.b16 %v499
    %v571 = vunpack.c.l.b16 %v500
    %v572 = vunpack.c.l.b16 %v501
    %v573 = vunpack.c.l.b16 %v502
    %v574 = vunpack.c.l.b16 %v503
    %v575 = vunpack.c.l.b16 %v504
    %v576 = vunpack.c.l.b16 %v505
    %v577 = vunpack.c.l.b16 %v506
    %v578 = vunpack.c.l.b16 %v507
    %v579 = vunpack.c.l.b16 %v508
    %v580 = vunpack.c.l.b16 %v509
    %v581 = vunpack.c.l.b16 %v510
    %v582 = vunpack.c.l.b16 %v511
    %v583 = vunpack.c.l.b16 %v512
    %v584 = vunpack.c.l.b16 %v513
    %v585 = vunpack.c.l.b16 %v514
    %v586 = vunpack.c.l.b16 %v515
    %v587 = vunpack.c.l.b16 %v516
    %v588 = vpack.c.b16 %v557, %v556
    %v589 = vpack.c.b16 %v559, %v558
    %v590 = vpack.c.b16 %v561, %v560
    %v591 = vpack.c.b16 %v563, %v562
    %v592 = vpack.c.b16 %v565, %v564
    %v593 = vpack.c.b16 %v567, %v566
    %v594 = vpack.c.b16 %v569, %v568
    %v595 = vpack.c.b16 %v571, %v570
    %v596 = vpack.c.b16 %v573, %v572
    %v597 = vpack.c.b16 %v575, %v574
    %v598 = vpack.c.b16 %v577, %v576
    %v599 = vpack.c.b16 %v579, %v578
    %v600 = vpack.c.b16 %v581, %v580
    %v601 = vpack.c.b16 %v583, %v582
    %v602 = vpack.c.b16 %v585, %v584
    %v603 = vpack.c.b16 %v587, %v586
    %620 = vmatprep.subr.bf16.mxu0 0
    %621 = vmatpush1.bf16.msra.mxu0 %v595
    %622 = vmatprep.subr.bf16.mxu0 0
    %623 = vmatpush1.bf16.msra.mxu0 %v594
    %624 = vmatprep.subr.bf16.mxu0 0
    %625 = vmatpush1.bf16.msra.mxu0 %v593
    %626 = vmatprep.subr.bf16.mxu0 0
    %627 = vmatpush1.bf16.msra.mxu0 %v592
    %628 = vmatprep.subr.bf16.mxu0 0
    %629 = vmatpush1.bf16.msra.mxu0 %v591
    %630 = vmatprep.subr.bf16.mxu0 0
    %631 = vmatpush1.bf16.msra.mxu0 %v590
    %632 = vmatprep.subr.bf16.mxu0 0
    %633 = vmatpush1.bf16.msra.mxu0 %v589
    %634 = vmatprep.subr.bf16.mxu0 0
    %635 = vmatpush1.bf16.msra.mxu0 %v588
    %636 = vmatprep.subr.bf16.mxu0 0
    %637 = vmatpush2.bf16.msra.mxu0 %v603
    %638 = vmatprep.subr.bf16.mxu0 0
    %639 = vmatpush2.bf16.msra.mxu0 %v602
    %640 = vmatprep.subr.bf16.mxu0 0
    %641 = vmatpush2.bf16.msra.mxu0 %v601
    %642 = vmatprep.subr.bf16.mxu0 0
    %643 = vmatpush2.bf16.msra.mxu0 %v600
    %644 = vmatprep.subr.bf16.mxu0 0
    %645 = vmatpush2.bf16.msra.mxu0 %v599
    %646 = vmatprep.subr.bf16.mxu0 0
    %647 = vmatpush2.bf16.msra.mxu0 %v598
    %648 = vmatprep.subr.bf16.mxu0 0
    %649 = vmatpush2.bf16.msra.mxu0 %v597
    %650 = vmatprep.subr.bf16.mxu0 0
    %651 = vmatpush2.bf16.msra.mxu0 %v596
    %652 = vmatprep.mubr.bf16.mxu0 %v484
    %653 = vmatmul.mubr.bf16.gmra.mxu0 %v483
    %v654 = vpop.f32.mrf.mxu0
    %v655 = vadd.f32 %v522, %v654
    %v656 = vpop.f32.mrf.mxu0
    %v657 = vpop.f32.mrf.mxu0
    %v658 = vpop.f32.mrf.mxu0
    %659 = vdwg.mxu0
    %v660 = vmax.f32 %v655, 0.0
    %v661 = vmin.f32 %v660, 2.0
    %v662 = vmul.f32 %v661, 1.442695
    %v663 = vpow.pop %v662
    %v664 = vlaneseq
    %v665 = vand.u32 %v664, 127
    %vm666 = vcmp.ge.s32.totalorder %v665, 4
    %v667 = vsel %vm666, %v663, %v655
    %668 = vst [vmem:[#allocation10] sm:$0xff] %v667
    // Predicated region
    $region46: #{tpu_custom_call.1} parent=1 // pred_check
      _
    $region47: #{tpu_custom_call.1} parent=1 // pred_check_branch
      %670 = sbr.rel (0) target = $region49
    $region48: #{tpu_custom_call.1} parent=1 // pred_region
      %s672 = ssub.s32 128, 128
      %673 = vsyncadd [#allocation4], %s672
      %s675 = sshll.u32 [#allocation10], 4
      %s676 = int_to_ptr.vmem [resolvable:$true] %s675
      %678 = dma.vmem_to_hbm [thread:$0]  %s676, 128, %s7, [#allocation4]
    $region49: #{tpu_custom_call.1} parent=1 // pred_fallthru
      _
    // Predicated region
    $region50: #{tpu_custom_call.1} parent=1 // pred_check
      _
    $region51: #{tpu_custom_call.1} parent=1 // pred_check_branch
      %680 = sbr.rel (0) target = $region53
    $region52: #{tpu_custom_call.1} parent=1 // pred_region
      %681 = dma.done [#allocation4], 128
    $region53: #{tpu_custom_call.1} parent=1 // pred_fallthru
      _
    %682 = vsyncpa [#allocation3], 1
    %683 = vsyncpa [#allocation6], 1
    %684 = vsyncpa [#allocation9], 1
    %685 = vsyncpa [#allocation4], 1

</llo_original>
